<compile_context>
chip_gen: v6e
topology: v6e:2x2x1
jax: 0.10.0
libtpu: 0.0.40
codegen_flags: <defaults>
</compile_context>

<pallas_src>
import numpy as np
import jax
import jax.numpy as jnp
from jax.experimental import pallas as pl
from jax.experimental.pallas import tpu as pltpu


_LANES = 128                              # vreg lane width
_SUBLANES = 8                             # vreg sublane count
_BLOCK_BUDGET_BYTES = 2 * 1024 * 1024     # ~2 MiB per x/out block (double-buffered)
_MAX_COL_TILE = 16384                     # max lanes per block (multiple of 128)


def _build_joint_pos(max_sequence_length: int, d_model: int) -> jnp.ndarray:
    """Deterministic positional-encoding table, exactly as in the PyTorch __init__.

    NOTE: reproduces the original indexing quirk joint_pos[:, 1::2] = cosines[:, ::2]
    (which, like the PyTorch code, only works for even d_model).
    """
    pos_idx = np.repeat(
        np.linspace(0.0, max_sequence_length - 1, max_sequence_length)[:, None],
        d_model, axis=1)
    i_idx = np.repeat(
        np.linspace(0.0, d_model - 1, d_model)[None, :],
        max_sequence_length, axis=0)
    sines = np.sin(pos_idx / 10000 ** (i_idx / d_model))
    cosines = np.cos(pos_idx / 10000 ** (i_idx / d_model))
    joint_pos = np.empty_like(sines)
    joint_pos[:, ::2] = sines[:, ::2]
    joint_pos[:, 1::2] = cosines[:, ::2]
    return jnp.asarray(joint_pos, dtype=jnp.float32)


def _largest_divisor(n: int, cap: int, multiple: int):
    """Largest divisor of `n` that is <= cap and a multiple of `multiple` (or None)."""
    cap = min(cap, n)
    d = (cap // multiple) * multiple
    while d >= multiple:
        if n % d == 0:
            return d
        d -= multiple
    return None


def _add_pos_kernel(x_ref, pos_ref, o_ref):
    # x_ref / o_ref: (TB, TC); pos_ref: (1, TC).
    # Single sublane-direction broadcast + VPU add, written lane-dense.
    o_ref[...] = x_ref[...] + pos_ref[...]


def positional_encoder(x: jnp.ndarray, joint_pos: jnp.ndarray) -> jnp.ndarray:
    """x: (B, S, D); joint_pos: (S, D) -> x + joint_pos broadcast over batch."""
    B, S, D = x.shape
    assert joint_pos.shape == (S, D)
    N = S * D
    itemsize = x.dtype.itemsize

    # Flatten so the kernel sees a lane-dense 2-D problem:
    #   x2:  (B, S*D)     pos2: (1, S*D)
    x2 = x.reshape(B, N)
    pos2 = joint_pos.reshape(1, N).astype(x.dtype)

    # --- tile selection --------------------------------------------------
    if N % _LANES == 0:
        tc = _largest_divisor(N, _MAX_COL_TILE, _LANES)   # lane-dense column tile
    else:
        tc = N                                            # full extent is always legal
    max_rows = max(1, _BLOCK_BUDGET_BYTES // (tc * itemsize))
    tb = (_largest_divisor(B, max_rows, _SUBLANES)        # prefer sublane-aligned rows
          or _largest_divisor(B, max_rows, 1)
          or B)
    grid = (N // tc, B // tb)   # (column tiles [outer], row tiles [inner])

    out2 = pl.pallas_call(
        _add_pos_kernel,
        out_shape=jax.ShapeDtypeStruct((B, N), x.dtype),
        grid=grid,
        in_specs=[
            # x: block depends on both grid axes.
            pl.BlockSpec((tb, tc), lambda ci, ri: (ri, ci)),
            # pos table: block index constant across the inner (row) axis ->
            # Pallas keeps the block resident, no redundant re-DMA per batch tile.
            pl.BlockSpec((1, tc), lambda ci, ri: (0, ci)),
        ],
        out_specs=pl.BlockSpec((tb, tc), lambda ci, ri: (ri, ci)),
        compiler_params=pltpu.CompilerParams(
            dimension_semantics=("parallel", "parallel")),
        cost_estimate=pl.CostEstimate(
            flops=B * N,
            transcendentals=0,
            bytes_accessed=(2 * B * N + N) * itemsize),
        # TODO(synk): if the caller no longer needs x, add
        # input_output_aliases={0: 0} (with argument donation) to make this an
        # in-place add; ideally this broadcast-add should just be fused into the
        # producing/consuming matmul kernel instead of a standalone HBM pass.
    )(x2, pos2)

    return out2.reshape(B, S, D)


if __name__ == "__main__":
    max_sequence_length = 8
    d_model = 32
    batch = 2

    key = jax.random.PRNGKey(0)
    x = jax.random.normal(key, (batch, max_sequence_length, d_model),
                          dtype=jnp.float32)

    joint_pos = _build_joint_pos(max_sequence_length, d_model)

    out = positional_encoder(x, joint_pos)
    out = jax.block_until_ready(out)

    # correctness check against plain JAX reference
    ref = x + joint_pos[None, :, :]
    assert out.shape == (batch, max_sequence_length, d_model)
    assert jnp.allclose(out, ref, atol=1e-6, rtol=1e-6)

    print("KERNEL_OK")
</pallas_src>

<mosaic_0001>
module attributes {stable_mosaic.version = 11 : i64} {
  func.func @_add_pos_kernel(%arg0: i32, %arg1: i32, %arg2: memref<2x256xf32, #tpu.memory_space<vmem>>, %arg3: memref<1x256xf32, #tpu.memory_space<vmem>>, %arg4: memref<2x256xf32, #tpu.memory_space<vmem>>) attributes {dimension_semantics = [#tpu.dimension_semantics<parallel>, #tpu.dimension_semantics<parallel>], iteration_bounds = array<i64: 1, 1>, scalar_prefetch = 0 : i64, scratch_operands = 0 : i64, tpu.core_type = #tpu.core_type<tc>, window_params = [{transform_indices = @transform_0, window_bounds = array<i64: 2, 256>}, {transform_indices = @transform_1, window_bounds = array<i64: 1, 256>}, {transform_indices = @transform_2, window_bounds = array<i64: 2, 256>}]} {
    %c0 = arith.constant 0 : index
    %c0_0 = arith.constant 0 : index
    %0 = vector.load %arg2[%c0, %c0_0] : memref<2x256xf32, #tpu.memory_space<vmem>>, vector<2x256xf32>
    %c0_1 = arith.constant 0 : index
    %c0_2 = arith.constant 0 : index
    %1 = vector.load %arg3[%c0_1, %c0_2] : memref<1x256xf32, #tpu.memory_space<vmem>>, vector<1x256xf32>
    %2 = vector.broadcast %1 : vector<1x256xf32> to vector<2x256xf32>
    %3 = arith.addf %0, %2 : vector<2x256xf32>
    %c0_3 = arith.constant 0 : index
    %c0_4 = arith.constant 0 : index
    %4 = vector.load %arg4[%c0_3, %c0_4] : memref<2x256xf32, #tpu.memory_space<vmem>>, vector<2x256xf32>
    tpu.vector_store %arg4[%c0_3, %c0_4], %3 {strides = array<i32>} : memref<2x256xf32, #tpu.memory_space<vmem>>, vector<2x256xf32>,
    return
  }
  func.func @transform_0(%arg0: i32, %arg1: i32) -> (i32, i32) {
    %c0_i32 = arith.constant 0 : i32
    return %arg1, %arg0 : i32, i32
  }
  func.func @transform_1(%arg0: i32, %arg1: i32) -> (i32, i32) {
    %c0_i32 = arith.constant 0 : i32
    %c0_i32_0 = arith.constant 0 : i32
    return %c0_i32, %arg0 : i32, i32
  }
  func.func @transform_2(%arg0: i32, %arg1: i32) -> (i32, i32) {
    %c0_i32 = arith.constant 0 : i32
    return %arg1, %arg0 : i32, i32
  }
}

</mosaic_0001>

<llo_original>
// kernel: tpu_custom_call.1
$region0: #{tpu_custom_call.1}
  #allocation0 [shape = 'u32[]', space=smem, size = 0x4, offset = 0x4, fixed_abs, tag = 'smem constant byte address 0x4 - core index']
  #allocation1 [shape = 'u32[144,128]{1,0:T(1,128)}', space=vmem, size = 0x12000, scoped, tag = 'internal scratch']
  %s0 = inlined_call_operand.hbm [shape: f32[2,256], index: 0, kind: input, shape index: {}]
  %s1 = inlined_call_operand.hbm [shape: f32[1,256], index: 1, kind: input, shape index: {}]
  %s2 = inlined_call_operand.hbm [shape: f32[2,256], index: 2, kind: output, shape index: {}]
  %s3 = sld [smem:[#allocation0]]
  $region26: #{tpu_custom_call.1} parent=0
    _
  %s5 = ssub.s32 1, %s3
  %s6 = scalar_select 0, %s5, %s3
  $region1: #{tpu_custom_call.1} parent=0
    #allocation2 [shape = 'u8[2048]{0}', space=vmem, size = 0x800, scoped, tag = 'input window, operand 0, single buffered']
    #allocation3 [shape = 's32[1]{0}', space=sflag, size = 0x4, scoped, tag = 'scoped memory for tpu_custom_call.1']
    #allocation4 [shape = 's32[1]{0}', space=sflag, size = 0x4, scoped, tag = 'scoped memory for tpu_custom_call.1']
    #allocation5 [shape = 'u8[1024]{0}', space=vmem, size = 0x400, scoped, tag = 'input window, operand 1, single buffered']
    #allocation6 [shape = 's32[1]{0}', space=sflag, size = 0x4, scoped, tag = 'scoped memory for tpu_custom_call.1']
    #allocation7 [shape = 'u8[2048]{0}', space=vmem, size = 0x800, scoped, tag = 'output window, operand 0, single buffered']
    %7 = vsyncpa [#allocation3], 0
    %8 = vsyncpa [#allocation6], 0
    %9 = vsyncpa [#allocation4], 0
    // Predicated region
    $region2: #{tpu_custom_call.1} parent=1 // pred_check
      _
    $region3: #{tpu_custom_call.1} parent=1 // pred_check_branch
      %11 = sbr.rel (0) target = $region5
    $region4: #{tpu_custom_call.1} parent=1 // pred_region
      %s13 = ssub.s32 64, 64
      %14 = vsyncadd [#allocation3], %s13
      %s16 = sshll.u32 [#allocation2], 4
      %s17 = int_to_ptr.vmem [resolvable:$true] %s16
      %19 = dma.hbm_to_vmem [thread:$0]  %s0, 64, %s17, [#allocation3]
    $region5: #{tpu_custom_call.1} parent=1 // pred_fallthru
      _
    // Predicated region
    $region6: #{tpu_custom_call.1} parent=1 // pred_check
      _
    $region7: #{tpu_custom_call.1} parent=1 // pred_check_branch
      %21 = sbr.rel (0) target = $region9
    $region8: #{tpu_custom_call.1} parent=1 // pred_region
      %s23 = ssub.s32 32, 32
      %24 = vsyncadd [#allocation6], %s23
      %s26 = sshll.u32 [#allocation5], 4
      %s27 = int_to_ptr.vmem [resolvable:$true] %s26
      %29 = dma.hbm_to_vmem [thread:$0]  %s1, 32, %s27, [#allocation6]
    $region9: #{tpu_custom_call.1} parent=1 // pred_fallthru
      _
    // Predicated region
    $region10: #{tpu_custom_call.1} parent=1 // pred_check
      _
    $region11: #{tpu_custom_call.1} parent=1 // pred_check_branch
      %31 = sbr.rel (0) target = $region13
    $region12: #{tpu_custom_call.1} parent=1 // pred_region
      %32 = dma.done [#allocation3], 64
    $region13: #{tpu_custom_call.1} parent=1 // pred_fallthru
      _
    // Predicated region
    $region14: #{tpu_custom_call.1} parent=1 // pred_check
      _
    $region15: #{tpu_custom_call.1} parent=1 // pred_check_branch
      %34 = sbr.rel (0) target = $region17
    $region16: #{tpu_custom_call.1} parent=1 // pred_region
      %35 = dma.done [#allocation6], 32
    $region17: #{tpu_custom_call.1} parent=1 // pred_fallthru
      _
    %v36 = vld [vmem:[#allocation2] sm:$0xf]
    %v37 = vld [vmem:[#allocation5] sm:$0x3]
    %v39 = vlaneseq
    %v40 = vshrl.u32 %v39, 7
    %v41 = vsub.s32 0, %v40
    %v42 = vrot.slane %v37, %v41
    %v43 = vlaneseq
    %v44 = vshrl.u32 %v43, 7
    %v45 = vsub.s32 1, %v44
    %v46 = vrot.slane %v37, %v45
    %v47 = vcombine.low %v42, %v46
    %v49 = vunpack.c.l.s4 1983009808
    %v50 = vunpack.c.0.s8 %v49
    %v51 = vlaneseq
    %v52 = vshrl.u32 %v51, 7
    %v53 = vsub.s32 %v50, %v52
    %v54 = vrot.slane %v47, %v53
    %v56 = vadd.f32 %v36, %v54
    %57 = vst [vmem:[#allocation7] sm:$0xf] %v56
    // Predicated region
    $region18: #{tpu_custom_call.1} parent=1 // pred_check
      _
    $region19: #{tpu_custom_call.1} parent=1 // pred_check_branch
      %59 = sbr.rel (0) target = $region21
    $region20: #{tpu_custom_call.1} parent=1 // pred_region
      %s61 = ssub.s32 64, 64
      %62 = vsyncadd [#allocation4], %s61
      %s64 = sshll.u32 [#allocation7], 4
      %s65 = int_to_ptr.vmem [resolvable:$true] %s64
      %67 = dma.vmem_to_hbm [thread:$0]  %s65, 64, %s2, [#allocation4]
    $region21: #{tpu_custom_call.1} parent=1 // pred_fallthru
      _
    // Predicated region
    $region22: #{tpu_custom_call.1} parent=1 // pred_check
      _
    $region23: #{tpu_custom_call.1} parent=1 // pred_check_branch
      %69 = sbr.rel (0) target = $region25
    $region24: #{tpu_custom_call.1} parent=1 // pred_region
      %70 = dma.done [#allocation4], 64
    $region25: #{tpu_custom_call.1} parent=1 // pred_fallthru
      _
    %71 = vsyncpa [#allocation3], 1
    %72 = vsyncpa [#allocation6], 1
    %73 = vsyncpa [#allocation4], 1

</llo_original>
